<compile_context>
chip_gen: v7x
topology: tpu7x:2x2x1
jax: 0.10.0
libtpu: 0.0.40
codegen_flags: <defaults>
</compile_context>

<pallas_src>
import jax
import jax.numpy as jnp
from jax import lax
from jax.experimental import pallas as pl
from jax.experimental.pallas import tpu as pltpu

NUM_CLASSES = 3
FEAT_DIM = 1000          # torch-side feature width (only used in the trace-time fold)
OUT_PAD = 128            # lane-dense output slab, sliced to NUM_CLASSES outside
BN_EPS = 1e-5


# --------------------------------------------------------------------------- #
# Kernel
# --------------------------------------------------------------------------- #
def fused_model_kernel(x_ref, wb_ref, out_ref):
    # x_ref : (TB, C, H*W) float32  -- image tile, lane-dense over H*W
    # wb_ref: (C+1, OUT_PAD) float32 -- rows 0..C-1 = fully folded weight, row C = bias
    # out_ref: (TB, OUT_PAD) float32
    C = x_ref.shape[1]

    # Backbone stand-in: global average pool over H*W (single lane reduction).
    # The 1/(H*W) scale is folded into wb, so a plain sum suffices.
    pooled = jnp.sum(x_ref[...], axis=-1)                # (TB, C), f32 VPU math

    wb = wb_ref[...]                                     # (C+1, OUT_PAD)

    # (B, C) x (C, OUT_PAD) as C broadcast FMAs (C is tiny & static -> unrolled).
    acc = pooled[:, 0:1] * wb[0:1, :]                    # (TB, OUT_PAD)
    for c in range(1, C):
        acc = acc + pooled[:, c:c + 1] * wb[c:c + 1, :]
    acc = acc + wb[C:C + 1, :]                           # fused bias row (broadcast over batch)

    # BatchNorm1d (eval) and Linear(1000->3) are already folded into wb.
    # Dropout(0.3): eval mode -> identity.
    out_ref[...] = acc.astype(out_ref.dtype)


# --------------------------------------------------------------------------- #
# Trace-time parameter folding (run ONCE, outside the forward path)
# --------------------------------------------------------------------------- #
def fold_params(params, in_channels, hw):
    """Fold pool-scale, backbone projection, eval-mode BN and classifier into one
    (C+1, OUT_PAD) slab. Everything after the pool is affine, so this is exact."""
    s = params["gamma"] * lax.rsqrt(params["var"] + BN_EPS)            # (1000,)
    w2 = params["w_cls"] * s[:, None]                                  # (1000, 3) BN-folded classifier
    w_comb = (params["w_feat"] @ w2) / float(hw)                       # (C, 3); 1/(H*W) folded in
    b_comb = (params["b_feat"] @ w2
              + (params["beta"] - params["mean"] * s) @ params["w_cls"]
              + params["b_cls"])                                       # (3,)

    wb = jnp.zeros((in_channels + 1, OUT_PAD), jnp.float32)            # zero pad -> exact math
    wb = wb.at[:in_channels, :NUM_CLASSES].set(w_comb)
    wb = wb.at[in_channels, :NUM_CLASSES].set(b_comb)
    return wb


def _pick_batch_tile(batch, channels, hw, itemsize):
    """Batch tile sized so double-buffered x tiles stay well under every chip's VMEM."""
    per_row = channels * hw * itemsize
    if batch <= 8:
        return batch, batch                       # single block == full (small) batch
    tb = 8                                        # keep out-block sublane aligned
    while tb * 2 <= min(batch, 128) and 2 * (tb * 2) * per_row <= (12 << 20):
        tb *= 2
    padded = ((batch + tb - 1) // tb) * tb
    return tb, padded


# --------------------------------------------------------------------------- #
# Forward (thin: reshape + pallas_call only; all folding already hoisted)
# --------------------------------------------------------------------------- #
@jax.jit
def build_model_forward(x, wb):
    B, C, H, W = x.shape
    hw = H * W

    x_flat = x.reshape(B, C, hw).astype(jnp.float32)     # lane-dense over H*W
    TB, Bp = _pick_batch_tile(B, C, hw, 4)
    if Bp != B:
        x_flat = jnp.concatenate(
            [x_flat, jnp.zeros((Bp - B, C, hw), x_flat.dtype)], axis=0)
    num_blocks = Bp // TB

    tile_x_bytes = TB * C * hw * 4
    tile_out_bytes = TB * OUT_PAD * 4
    wb_bytes = (C + 1) * OUT_PAD * 4
    vmem_limit = int(min(48 << 20,
                         max(16 << 20,
                             2 * tile_x_bytes + 2 * tile_out_bytes + wb_bytes + (1 << 20))))

    cost = pl.CostEstimate(
        flops=2 * Bp * C * hw + 2 * Bp * (C + 1) * OUT_PAD,
        transcendentals=0,
        bytes_accessed=Bp * C * hw * 4 + wb_bytes + Bp * OUT_PAD * 4,
    )

    out_pad = pl.pallas_call(
        fused_model_kernel,
        out_shape=jax.ShapeDtypeStruct((Bp, OUT_PAD), jnp.float32),
        grid=(num_blocks,),
        in_specs=[
            pl.BlockSpec((TB, C, hw), lambda b: (b, 0, 0)),        # image tile (pipelined)
            pl.BlockSpec((C + 1, OUT_PAD), lambda b: (0, 0)),      # weight slab, resident
        ],
        out_specs=pl.BlockSpec((TB, OUT_PAD), lambda b: (b, 0)),
        compiler_params=pltpu.CompilerParams(
            dimension_semantics=("parallel",),
            vmem_limit_bytes=vmem_limit,
        ),
        cost_estimate=cost,
    )(x_flat, wb)
    return out_pad[:B, :NUM_CLASSES]


# --------------------------------------------------------------------------- #
# Parameters / reference
# --------------------------------------------------------------------------- #
def init_params(key, in_channels):
    k1, k2, k3, k4, k5, k6, k7 = jax.random.split(key, 7)
    return {
        # backbone stand-in projection C -> 1000
        "w_feat": (1.0 / jnp.sqrt(in_channels)) *
                  jax.random.normal(k1, (in_channels, FEAT_DIM), jnp.float32),
        "b_feat": 0.1 * jax.random.normal(k3, (FEAT_DIM,), jnp.float32),
        # BatchNorm1d(1000) eval-mode parameters / running stats (non-trivial to
        # exercise the fold; torch defaults would be 1/0/0/1)
        "gamma": 0.5 + jax.random.uniform(k4, (FEAT_DIM,), jnp.float32),
        "beta": 0.1 * jax.random.normal(k5, (FEAT_DIM,), jnp.float32),
        "mean": 0.1 * jax.random.normal(k6, (FEAT_DIM,), jnp.float32),
        "var": 0.5 + jax.random.uniform(k7, (FEAT_DIM,), jnp.float32),
        # Linear(1000, 3)
        "w_cls": (1.0 / jnp.sqrt(FEAT_DIM)) *
                 jax.random.normal(k2, (FEAT_DIM, NUM_CLASSES), jnp.float32),
        "b_cls": jnp.zeros((NUM_CLASSES,), jnp.float32),
    }


def reference_forward(x, params):
    """Pure-jnp unfused reference (stand-in backbone -> BN(eval) -> dropout(eval) -> linear)."""
    B, C, H, W = x.shape
    pooled = x.reshape(B, C, H * W).mean(axis=-1)
    feat = pooled @ params["w_feat"] + params["b_feat"]
    s = params["gamma"] / jnp.sqrt(params["var"] + BN_EPS)
    bn = (feat - params["mean"]) * s + params["beta"]
    return bn @ params["w_cls"] + params["b_cls"]


if __name__ == "__main__":
    key = jax.random.PRNGKey(0)
    kx, kp = jax.random.split(key)

    B, C, H, W = 2, 3, 16, 16                 # small RGB images, NCHW like PyTorch
    x = jax.random.normal(kx, (B, C, H, W), jnp.float32)
    params = init_params(kp, C)

    # Hoisted: fold parameters once; every forward call reuses the cached slab.
    wb = jax.block_until_ready(fold_params(params, C, H * W))

    out = build_model_forward(x, wb)
    jax.block_until_ready(out)

    assert out.shape == (B, NUM_CLASSES) and out.dtype == jnp.float32
    ref = reference_forward(x, params)
    assert jnp.allclose(out, ref, rtol=1e-2, atol=1e-2), (out, ref)
    print("KERNEL_OK")
</pallas_src>

<mosaic_0001>
module attributes {stable_mosaic.version = 11 : i64} {
  func.func @fused_model_kernel(%arg0: i32, %arg1: memref<2x3x256xf32, #tpu.memory_space<vmem>>, %arg2: memref<4x128xf32, #tpu.memory_space<vmem>>, %arg3: memref<2x128xf32, #tpu.memory_space<vmem>>) attributes {dimension_semantics = [#tpu.dimension_semantics<parallel>], iteration_bounds = array<i64: 1>, scalar_prefetch = 0 : i64, scratch_operands = 0 : i64, tpu.core_type = #tpu.core_type<tc>, window_params = [{transform_indices = @transform_0, window_bounds = array<i64: 2, 3, 256>}, {pipeline_mode = #tpu.pipeline_mode<synchronous>, transform_indices = @transform_1, window_bounds = array<i64: 4, 128>}, {transform_indices = @transform_2, window_bounds = array<i64: 2, 128>}]} {
    %c0 = arith.constant 0 : index
    %c0_0 = arith.constant 0 : index
    %c0_1 = arith.constant 0 : index
    %0 = vector.load %arg1[%c0, %c0_0, %c0_1] : memref<2x3x256xf32, #tpu.memory_space<vmem>>, vector<2x3x256xf32>
    %cst = arith.constant dense<0.000000e+00> : vector<2x3xf32>
    %1 = vector.multi_reduction <add>, %0, %cst [2] : vector<2x3x256xf32> to vector<2x3xf32>
    %c0_2 = arith.constant 0 : index
    %c0_3 = arith.constant 0 : index
    %2 = vector.load %arg2[%c0_2, %c0_3] : memref<4x128xf32, #tpu.memory_space<vmem>>, vector<4x128xf32>
    %3 = vector.extract_strided_slice %1 {offsets = [0, 0], sizes = [2, 1], strides = [1, 1]} : vector<2x3xf32> to vector<2x1xf32>
    %4 = vector.extract_strided_slice %2 {offsets = [0, 0], sizes = [1, 128], strides = [1, 1]} : vector<4x128xf32> to vector<1x128xf32>
    %5 = vector.broadcast %3 : vector<2x1xf32> to vector<2x128xf32>
    %6 = vector.broadcast %4 : vector<1x128xf32> to vector<2x128xf32>
    %7 = arith.mulf %5, %6 : vector<2x128xf32>
    %8 = vector.extract_strided_slice %1 {offsets = [0, 1], sizes = [2, 1], strides = [1, 1]} : vector<2x3xf32> to vector<2x1xf32>
    %9 = vector.extract_strided_slice %2 {offsets = [1, 0], sizes = [1, 128], strides = [1, 1]} : vector<4x128xf32> to vector<1x128xf32>
    %10 = vector.broadcast %8 : vector<2x1xf32> to vector<2x128xf32>
    %11 = vector.broadcast %9 : vector<1x128xf32> to vector<2x128xf32>
    %12 = arith.mulf %10, %11 : vector<2x128xf32>
    %13 = arith.addf %7, %12 : vector<2x128xf32>
    %14 = vector.extract_strided_slice %1 {offsets = [0, 2], sizes = [2, 1], strides = [1, 1]} : vector<2x3xf32> to vector<2x1xf32>
    %15 = vector.extract_strided_slice %2 {offsets = [2, 0], sizes = [1, 128], strides = [1, 1]} : vector<4x128xf32> to vector<1x128xf32>
    %16 = vector.broadcast %14 : vector<2x1xf32> to vector<2x128xf32>
    %17 = vector.broadcast %15 : vector<1x128xf32> to vector<2x128xf32>
    %18 = arith.mulf %16, %17 : vector<2x128xf32>
    %19 = arith.addf %13, %18 : vector<2x128xf32>
    %20 = vector.extract_strided_slice %2 {offsets = [3, 0], sizes = [1, 128], strides = [1, 1]} : vector<4x128xf32> to vector<1x128xf32>
    %21 = vector.broadcast %20 : vector<1x128xf32> to vector<2x128xf32>
    %22 = arith.addf %19, %21 : vector<2x128xf32>
    %c0_4 = arith.constant 0 : index
    %c0_5 = arith.constant 0 : index
    %23 = vector.load %arg3[%c0_4, %c0_5] : memref<2x128xf32, #tpu.memory_space<vmem>>, vector<2x128xf32>
    tpu.vector_store %arg3[%c0_4, %c0_5], %22 {strides = array<i32>} : memref<2x128xf32, #tpu.memory_space<vmem>>, vector<2x128xf32>,
    return
  }
  func.func @transform_0(%arg0: i32) -> (i32, i32, i32) {
    %c0_i32 = arith.constant 0 : i32
    %c0_i32_0 = arith.constant 0 : i32
    %c0_i32_1 = arith.constant 0 : i32
    return %arg0, %c0_i32, %c0_i32_0 : i32, i32, i32
  }
  func.func @transform_1(%arg0: i32) -> (i32, i32) {
    %c0_i32 = arith.constant 0 : i32
    %c0_i32_0 = arith.constant 0 : i32
    %c0_i32_1 = arith.constant 0 : i32
    return %c0_i32, %c0_i32_0 : i32, i32
  }
  func.func @transform_2(%arg0: i32) -> (i32, i32) {
    %c0_i32 = arith.constant 0 : i32
    %c0_i32_0 = arith.constant 0 : i32
    return %arg0, %c0_i32 : i32, i32
  }
}

</mosaic_0001>

<llo_original>
// kernel: build_model_forward.1
$region0: #{build_model_forward.1}
  #allocation0 [shape = 'u32[]', space=smem, size = 0x4, offset = 0x4, fixed_abs, tag = 'smem constant byte address 0x4 - core index']
  #allocation1 [shape = 'u32[144,128]{1,0:T(1,128)}', space=vmem, size = 0x12000, scoped, tag = 'internal scratch']
  %s0 = inlined_call_operand.vmem [shape: f32[2,3,256], index: 0, kind: input, shape index: {}]
  %s1 = inlined_call_operand.vmem [shape: f32[4,128], index: 1, kind: input, shape index: {}]
  %s2 = inlined_call_operand.hbm [shape: f32[2,128], index: 2, kind: output, shape index: {}]
  %s3 = sld [smem:[#allocation0]]
  $region18: #{build_model_forward.1} parent=0
    _
  %s5 = ssub.s32 1, %s3
  %s6 = scalar_select 0, %s5, %s3
  $region1: #{build_model_forward.1} parent=0
    #allocation2 [shape = 'u8[1024]{0}', space=vmem, size = 0x400, scoped, tag = 'output window, operand 0, single buffered']
    #allocation3 [shape = 's32[1]{0}', space=sflag, size = 0x4, scoped, tag = 'scoped memory for build_model_forward.1']
    %7 = vsyncpa [#allocation3], 0
    // Predicated region
    $region2: #{build_model_forward.1} parent=1 // pred_check
      _
    $region3: #{build_model_forward.1} parent=1 // pred_check_branch
      %9 = sbr.rel (0) target = $region5
    $region4: #{build_model_forward.1} parent=1 // pred_region
      _
    $region5: #{build_model_forward.1} parent=1 // pred_fallthru
      _
    // Predicated region
    $region6: #{build_model_forward.1} parent=1 // pred_check
      _
    $region7: #{build_model_forward.1} parent=1 // pred_check_branch
      %11 = sbr.rel (0) target = $region9
    $region8: #{build_model_forward.1} parent=1 // pred_region
      _
    $region9: #{build_model_forward.1} parent=1 // pred_fallthru
      _
    %v12 = vld [vmem:[%s0] sm:$0x77]
    %v13 = vld [vmem:[%s0 + $0x8] sm:$0x77]
    %v16 = vcombine.high %v12, %v12
    %v17 = vcombine.high %v13, %v13
    %vm20 = vcmask 1042432
    %v21 = vsel %vm20, %v12, 0.0
    %v22 = vsel %vm20, %v16, 0.0
    %v23 = vadd.f32 %v21, %v22
    %24 = vadd.xlane.f32.xlu0 %v23
    %v25 = vpop.xlane.xlu0 %24
    %v26 = vsel %vm20, %v13, 0.0
    %v27 = vsel %vm20, %v17, 0.0
    %v28 = vadd.f32 %v26, %v27
    %29 = vadd.xlane.f32.xlu0 %v28
    %v30 = vpop.xlane.xlu0 %29
    %v31 = vld [vmem:[%s1] sm:$0xf]
    %v32 = vlaneseq
    %v33 = vshrl.u32 %v32, 7
    %v34 = vsub.s32 0, %v33
    %v35 = vrot.slane %v25, %v34
    %v36 = vlaneseq
    %v37 = vshrl.u32 %v36, 7
    %v38 = vsub.s32 0, %v37
    %v39 = vrot.slane %v30, %v38
    %v40 = vlaneseq
    %v41 = vshrl.u32 %v40, 7
    %v42 = vsub.s32 0, %v41
    %v43 = vrot.slane %v31, %v42
    %46 = vbcast.lane.b32.xlu0 %v43, 256
    %v47 = vpop.permute.xlu0 %46
    %s49 = sor.u32 256, 8
    %50 = vbcast.lane.b32.xlu0 %v43, %s49
    %v51 = vpop.permute.xlu0 %50
    %s53 = sor.u32 256, 16
    %54 = vbcast.lane.b32.xlu0 %v43, %s53
    %v55 = vpop.permute.xlu0 %54
    %s57 = sor.u32 256, 24
    %58 = vbcast.lane.b32.xlu0 %v43, %s57
    %v59 = vpop.permute.xlu0 %58
    %s61 = sor.u32 256, 32
    %62 = vbcast.lane.b32.xlu0 %v43, %s61
    %v63 = vpop.permute.xlu0 %62
    %s65 = sor.u32 256, 40
    %66 = vbcast.lane.b32.xlu0 %v43, %s65
    %v67 = vpop.permute.xlu0 %66
    %s69 = sor.u32 256, 48
    %70 = vbcast.lane.b32.xlu0 %v43, %s69
    %v71 = vpop.permute.xlu0 %70
    %s73 = sor.u32 256, 56
    %74 = vbcast.lane.b32.xlu0 %v43, %s73
    %v75 = vpop.permute.xlu0 %74
    %s77 = sor.u32 256, 64
    %78 = vbcast.lane.b32.xlu0 %v43, %s77
    %v79 = vpop.permute.xlu0 %78
    %s81 = sor.u32 256, 72
    %82 = vbcast.lane.b32.xlu0 %v43, %s81
    %v83 = vpop.permute.xlu0 %82
    %s85 = sor.u32 256, 80
    %86 = vbcast.lane.b32.xlu0 %v43, %s85
    %v87 = vpop.permute.xlu0 %86
    %s89 = sor.u32 256, 88
    %90 = vbcast.lane.b32.xlu0 %v43, %s89
    %v91 = vpop.permute.xlu0 %90
    %s93 = sor.u32 256, 96
    %94 = vbcast.lane.b32.xlu0 %v43, %s93
    %v95 = vpop.permute.xlu0 %94
    %s97 = sor.u32 256, 104
    %98 = vbcast.lane.b32.xlu0 %v43, %s97
    %v99 = vpop.permute.xlu0 %98
    %s101 = sor.u32 256, 112
    %102 = vbcast.lane.b32.xlu0 %v43, %s101
    %v103 = vpop.permute.xlu0 %102
    %s105 = sor.u32 256, 120
    %106 = vbcast.lane.b32.xlu0 %v43, %s105
    %v107 = vpop.permute.xlu0 %106
    %v124 = vmul.f32 %v35, %v47
    %v125 = vmul.f32 %v35, %v51
    %v126 = vmul.f32 %v35, %v55
    %v127 = vmul.f32 %v35, %v59
    %v128 = vmul.f32 %v35, %v63
    %v129 = vmul.f32 %v35, %v67
    %v130 = vmul.f32 %v35, %v71
    %v131 = vmul.f32 %v35, %v75
    %v132 = vmul.f32 %v35, %v79
    %v133 = vmul.f32 %v35, %v83
    %v134 = vmul.f32 %v35, %v87
    %v135 = vmul.f32 %v35, %v91
    %v136 = vmul.f32 %v35, %v95
    %v137 = vmul.f32 %v35, %v99
    %v138 = vmul.f32 %v35, %v103
    %v139 = vmul.f32 %v35, %v107
    %v140 = vmul.f32 %v39, %v47
    %v141 = vmul.f32 %v39, %v51
    %v142 = vmul.f32 %v39, %v55
    %v143 = vmul.f32 %v39, %v59
    %v144 = vmul.f32 %v39, %v63
    %v145 = vmul.f32 %v39, %v67
    %v146 = vmul.f32 %v39, %v71
    %v147 = vmul.f32 %v39, %v75
    %v148 = vmul.f32 %v39, %v79
    %v149 = vmul.f32 %v39, %v83
    %v150 = vmul.f32 %v39, %v87
    %v151 = vmul.f32 %v39, %v91
    %v152 = vmul.f32 %v39, %v95
    %v153 = vmul.f32 %v39, %v99
    %v154 = vmul.f32 %v39, %v103
    %v155 = vmul.f32 %v39, %v107
    %v156 = vlaneseq
    %v157 = vshrl.u32 %v156, 7
    %v158 = vsub.s32 1, %v157
    %v159 = vrot.slane %v25, %v158
    %v160 = vlaneseq
    %v161 = vshrl.u32 %v160, 7
    %v162 = vsub.s32 1, %v161
    %v163 = vrot.slane %v30, %v162
    %v164 = vlaneseq
    %v165 = vshrl.u32 %v164, 7
    %v166 = vsub.s32 1, %v165
    %v167 = vrot.slane %v31, %v166
    %170 = vbcast.lane.b32.xlu0 %v167, 256
    %v171 = vpop.permute.xlu0 %170
    %s173 = sor.u32 256, 8
    %174 = vbcast.lane.b32.xlu0 %v167, %s173
    %v175 = vpop.permute.xlu0 %174
    %s177 = sor.u32 256, 16
    %178 = vbcast.lane.b32.xlu0 %v167, %s177
    %v179 = vpop.permute.xlu0 %178
    %s181 = sor.u32 256, 24
    %182 = vbcast.lane.b32.xlu0 %v167, %s181
    %v183 = vpop.permute.xlu0 %182
    %s185 = sor.u32 256, 32
    %186 = vbcast.lane.b32.xlu0 %v167, %s185
    %v187 = vpop.permute.xlu0 %186
    %s189 = sor.u32 256, 40
    %190 = vbcast.lane.b32.xlu0 %v167, %s189
    %v191 = vpop.permute.xlu0 %190
    %s193 = sor.u32 256, 48
    %194 = vbcast.lane.b32.xlu0 %v167, %s193
    %v195 = vpop.permute.xlu0 %194
    %s197 = sor.u32 256, 56
    %198 = vbcast.lane.b32.xlu0 %v167, %s197
    %v199 = vpop.permute.xlu0 %198
    %s201 = sor.u32 256, 64
    %202 = vbcast.lane.b32.xlu0 %v167, %s201
    %v203 = vpop.permute.xlu0 %202
    %s205 = sor.u32 256, 72
    %206 = vbcast.lane.b32.xlu0 %v167, %s205
    %v207 = vpop.permute.xlu0 %206
    %s209 = sor.u32 256, 80
    %210 = vbcast.lane.b32.xlu0 %v167, %s209
    %v211 = vpop.permute.xlu0 %210
    %s213 = sor.u32 256, 88
    %214 = vbcast.lane.b32.xlu0 %v167, %s213
    %v215 = vpop.permute.xlu0 %214
    %s217 = sor.u32 256, 96
    %218 = vbcast.lane.b32.xlu0 %v167, %s217
    %v219 = vpop.permute.xlu0 %218
    %s221 = sor.u32 256, 104
    %222 = vbcast.lane.b32.xlu0 %v167, %s221
    %v223 = vpop.permute.xlu0 %222
    %s225 = sor.u32 256, 112
    %226 = vbcast.lane.b32.xlu0 %v167, %s225
    %v227 = vpop.permute.xlu0 %226
    %s229 = sor.u32 256, 120
    %230 = vbcast.lane.b32.xlu0 %v167, %s229
    %v231 = vpop.permute.xlu0 %230
    %v248 = vmul.f32 %v159, %v171
    %v249 = vmul.f32 %v159, %v175
    %v250 = vmul.f32 %v159, %v179
    %v251 = vmul.f32 %v159, %v183
    %v252 = vmul.f32 %v159, %v187
    %v253 = vmul.f32 %v159, %v191
    %v254 = vmul.f32 %v159, %v195
    %v255 = vmul.f32 %v159, %v199
    %v256 = vmul.f32 %v159, %v203
    %v257 = vmul.f32 %v159, %v207
    %v258 = vmul.f32 %v159, %v211
    %v259 = vmul.f32 %v159, %v215
    %v260 = vmul.f32 %v159, %v219
    %v261 = vmul.f32 %v159, %v223
    %v262 = vmul.f32 %v159, %v227
    %v263 = vmul.f32 %v159, %v231
    %v264 = vmul.f32 %v163, %v171
    %v265 = vmul.f32 %v163, %v175
    %v266 = vmul.f32 %v163, %v179
    %v267 = vmul.f32 %v163, %v183
    %v268 = vmul.f32 %v163, %v187
    %v269 = vmul.f32 %v163, %v191
    %v270 = vmul.f32 %v163, %v195
    %v271 = vmul.f32 %v163, %v199
    %v272 = vmul.f32 %v163, %v203
    %v273 = vmul.f32 %v163, %v207
    %v274 = vmul.f32 %v163, %v211
    %v275 = vmul.f32 %v163, %v215
    %v276 = vmul.f32 %v163, %v219
    %v277 = vmul.f32 %v163, %v223
    %v278 = vmul.f32 %v163, %v227
    %v279 = vmul.f32 %v163, %v231
    %v280 = vadd.f32 %v124, %v248
    %v281 = vadd.f32 %v125, %v249
    %v282 = vadd.f32 %v126, %v250
    %v283 = vadd.f32 %v127, %v251
    %v284 = vadd.f32 %v128, %v252
    %v285 = vadd.f32 %v129, %v253
    %v286 = vadd.f32 %v130, %v254
    %v287 = vadd.f32 %v131, %v255
    %v288 = vadd.f32 %v132, %v256
    %v289 = vadd.f32 %v133, %v257
    %v290 = vadd.f32 %v134, %v258
    %v291 = vadd.f32 %v135, %v259
    %v292 = vadd.f32 %v136, %v260
    %v293 = vadd.f32 %v137, %v261
    %v294 = vadd.f32 %v138, %v262
    %v295 = vadd.f32 %v139, %v263
    %v296 = vadd.f32 %v140, %v264
    %v297 = vadd.f32 %v141, %v265
    %v298 = vadd.f32 %v142, %v266
    %v299 = vadd.f32 %v143, %v267
    %v300 = vadd.f32 %v144, %v268
    %v301 = vadd.f32 %v145, %v269
    %v302 = vadd.f32 %v146, %v270
    %v303 = vadd.f32 %v147, %v271
    %v304 = vadd.f32 %v148, %v272
    %v305 = vadd.f32 %v149, %v273
    %v306 = vadd.f32 %v150, %v274
    %v307 = vadd.f32 %v151, %v275
    %v308 = vadd.f32 %v152, %v276
    %v309 = vadd.f32 %v153, %v277
    %v310 = vadd.f32 %v154, %v278
    %v311 = vadd.f32 %v155, %v279
    %v312 = vlaneseq
    %v313 = vshrl.u32 %v312, 7
    %v314 = vsub.s32 2, %v313
    %v315 = vrot.slane %v25, %v314
    %v316 = vlaneseq
    %v317 = vshrl.u32 %v316, 7
    %v318 = vsub.s32 2, %v317
    %v319 = vrot.slane %v30, %v318
    %v320 = vlaneseq
    %v321 = vshrl.u32 %v320, 7
    %v322 = vsub.s32 2, %v321
    %v323 = vrot.slane %v31, %v322
    %326 = vbcast.lane.b32.xlu0 %v323, 256
    %v327 = vpop.permute.xlu0 %326
    %s329 = sor.u32 256, 8
    %330 = vbcast.lane.b32.xlu0 %v323, %s329
    %v331 = vpop.permute.xlu0 %330
    %s333 = sor.u32 256, 16
    %334 = vbcast.lane.b32.xlu0 %v323, %s333
    %v335 = vpop.permute.xlu0 %334
    %s337 = sor.u32 256, 24
    %338 = vbcast.lane.b32.xlu0 %v323, %s337
    %v339 = vpop.permute.xlu0 %338
    %s341 = sor.u32 256, 32
    %342 = vbcast.lane.b32.xlu0 %v323, %s341
    %v343 = vpop.permute.xlu0 %342
    %s345 = sor.u32 256, 40
    %346 = vbcast.lane.b32.xlu0 %v323, %s345
    %v347 = vpop.permute.xlu0 %346
    %s349 = sor.u32 256, 48
    %350 = vbcast.lane.b32.xlu0 %v323, %s349
    %v351 = vpop.permute.xlu0 %350
    %s353 = sor.u32 256, 56
    %354 = vbcast.lane.b32.xlu0 %v323, %s353
    %v355 = vpop.permute.xlu0 %354
    %s357 = sor.u32 256, 64
    %358 = vbcast.lane.b32.xlu0 %v323, %s357
    %v359 = vpop.permute.xlu0 %358
    %s361 = sor.u32 256, 72
    %362 = vbcast.lane.b32.xlu0 %v323, %s361
    %v363 = vpop.permute.xlu0 %362
    %s365 = sor.u32 256, 80
    %366 = vbcast.lane.b32.xlu0 %v323, %s365
    %v367 = vpop.permute.xlu0 %366
    %s369 = sor.u32 256, 88
    %370 = vbcast.lane.b32.xlu0 %v323, %s369
    %v371 = vpop.permute.xlu0 %370
    %s373 = sor.u32 256, 96
    %374 = vbcast.lane.b32.xlu0 %v323, %s373
    %v375 = vpop.permute.xlu0 %374
    %s377 = sor.u32 256, 104
    %378 = vbcast.lane.b32.xlu0 %v323, %s377
    %v379 = vpop.permute.xlu0 %378
    %s381 = sor.u32 256, 112
    %382 = vbcast.lane.b32.xlu0 %v323, %s381
    %v383 = vpop.permute.xlu0 %382
    %s385 = sor.u32 256, 120
    %386 = vbcast.lane.b32.xlu0 %v323, %s385
    %v387 = vpop.permute.xlu0 %386
    %v404 = vmul.f32 %v315, %v327
    %v405 = vmul.f32 %v315, %v331
    %v406 = vmul.f32 %v315, %v335
    %v407 = vmul.f32 %v315, %v339
    %v408 = vmul.f32 %v315, %v343
    %v409 = vmul.f32 %v315, %v347
    %v410 = vmul.f32 %v315, %v351
    %v411 = vmul.f32 %v315, %v355
    %v412 = vmul.f32 %v315, %v359
    %v413 = vmul.f32 %v315, %v363
    %v414 = vmul.f32 %v315, %v367
    %v415 = vmul.f32 %v315, %v371
    %v416 = vmul.f32 %v315, %v375
    %v417 = vmul.f32 %v315, %v379
    %v418 = vmul.f32 %v315, %v383
    %v419 = vmul.f32 %v315, %v387
    %v420 = vmul.f32 %v319, %v327
    %v421 = vmul.f32 %v319, %v331
    %v422 = vmul.f32 %v319, %v335
    %v423 = vmul.f32 %v319, %v339
    %v424 = vmul.f32 %v319, %v343
    %v425 = vmul.f32 %v319, %v347
    %v426 = vmul.f32 %v319, %v351
    %v427 = vmul.f32 %v319, %v355
    %v428 = vmul.f32 %v319, %v359
    %v429 = vmul.f32 %v319, %v363
    %v430 = vmul.f32 %v319, %v367
    %v431 = vmul.f32 %v319, %v371
    %v432 = vmul.f32 %v319, %v375
    %v433 = vmul.f32 %v319, %v379
    %v434 = vmul.f32 %v319, %v383
    %v435 = vmul.f32 %v319, %v387
    %v436 = vadd.f32 %v280, %v404
    %v437 = vadd.f32 %v281, %v405
    %v438 = vadd.f32 %v282, %v406
    %v439 = vadd.f32 %v283, %v407
    %v440 = vadd.f32 %v284, %v408
    %v441 = vadd.f32 %v285, %v409
    %v442 = vadd.f32 %v286, %v410
    %v443 = vadd.f32 %v287, %v411
    %v444 = vadd.f32 %v288, %v412
    %v445 = vadd.f32 %v289, %v413
    %v446 = vadd.f32 %v290, %v414
    %v447 = vadd.f32 %v291, %v415
    %v448 = vadd.f32 %v292, %v416
    %v449 = vadd.f32 %v293, %v417
    %v450 = vadd.f32 %v294, %v418
    %v451 = vadd.f32 %v295, %v419
    %v452 = vadd.f32 %v296, %v420
    %v453 = vadd.f32 %v297, %v421
    %v454 = vadd.f32 %v298, %v422
    %v455 = vadd.f32 %v299, %v423
    %v456 = vadd.f32 %v300, %v424
    %v457 = vadd.f32 %v301, %v425
    %v458 = vadd.f32 %v302, %v426
    %v459 = vadd.f32 %v303, %v427
    %v460 = vadd.f32 %v304, %v428
    %v461 = vadd.f32 %v305, %v429
    %v462 = vadd.f32 %v306, %v430
    %v463 = vadd.f32 %v307, %v431
    %v464 = vadd.f32 %v308, %v432
    %v465 = vadd.f32 %v309, %v433
    %v466 = vadd.f32 %v310, %v434
    %v467 = vadd.f32 %v311, %v435
    %v468 = vlaneseq
    %v469 = vshrl.u32 %v468, 7
    %v470 = vsub.s32 3, %v469
    %v471 = vrot.slane %v31, %v470
    %474 = vbcast.lane.b32.xlu0 %v471, 256
    %v475 = vpop.permute.xlu0 %474
    %s477 = sor.u32 256, 8
    %478 = vbcast.lane.b32.xlu0 %v471, %s477
    %v479 = vpop.permute.xlu0 %478
    %s481 = sor.u32 256, 16
    %482 = vbcast.lane.b32.xlu0 %v471, %s481
    %v483 = vpop.permute.xlu0 %482
    %s485 = sor.u32 256, 24
    %486 = vbcast.lane.b32.xlu0 %v471, %s485
    %v487 = vpop.permute.xlu0 %486
    %s489 = sor.u32 256, 32
    %490 = vbcast.lane.b32.xlu0 %v471, %s489
    %v491 = vpop.permute.xlu0 %490
    %s493 = sor.u32 256, 40
    %494 = vbcast.lane.b32.xlu0 %v471, %s493
    %v495 = vpop.permute.xlu0 %494
    %s497 = sor.u32 256, 48
    %498 = vbcast.lane.b32.xlu0 %v471, %s497
    %v499 = vpop.permute.xlu0 %498
    %s501 = sor.u32 256, 56
    %502 = vbcast.lane.b32.xlu0 %v471, %s501
    %v503 = vpop.permute.xlu0 %502
    %s505 = sor.u32 256, 64
    %506 = vbcast.lane.b32.xlu0 %v471, %s505
    %v507 = vpop.permute.xlu0 %506
    %s509 = sor.u32 256, 72
    %510 = vbcast.lane.b32.xlu0 %v471, %s509
    %v511 = vpop.permute.xlu0 %510
    %s513 = sor.u32 256, 80
    %514 = vbcast.lane.b32.xlu0 %v471, %s513
    %v515 = vpop.permute.xlu0 %514
    %s517 = sor.u32 256, 88
    %518 = vbcast.lane.b32.xlu0 %v471, %s517
    %v519 = vpop.permute.xlu0 %518
    %s521 = sor.u32 256, 96
    %522 = vbcast.lane.b32.xlu0 %v471, %s521
    %v523 = vpop.permute.xlu0 %522
    %s525 = sor.u32 256, 104
    %526 = vbcast.lane.b32.xlu0 %v471, %s525
    %v527 = vpop.permute.xlu0 %526
    %s529 = sor.u32 256, 112
    %530 = vbcast.lane.b32.xlu0 %v471, %s529
    %v531 = vpop.permute.xlu0 %530
    %s533 = sor.u32 256, 120
    %534 = vbcast.lane.b32.xlu0 %v471, %s533
    %v535 = vpop.permute.xlu0 %534
    %v552 = vadd.f32 %v436, %v475
    %v553 = vadd.f32 %v437, %v479
    %v554 = vadd.f32 %v438, %v483
    %v555 = vadd.f32 %v439, %v487
    %v556 = vadd.f32 %v440, %v491
    %v557 = vadd.f32 %v441, %v495
    %v558 = vadd.f32 %v442, %v499
    %v559 = vadd.f32 %v443, %v503
    %v560 = vadd.f32 %v444, %v507
    %v561 = vadd.f32 %v445, %v511
    %v562 = vadd.f32 %v446, %v515
    %v563 = vadd.f32 %v447, %v519
    %v564 = vadd.f32 %v448, %v523
    %v565 = vadd.f32 %v449, %v527
    %v566 = vadd.f32 %v450, %v531
    %v567 = vadd.f32 %v451, %v535
    %v568 = vadd.f32 %v452, %v475
    %v569 = vadd.f32 %v453, %v479
    %v570 = vadd.f32 %v454, %v483
    %v571 = vadd.f32 %v455, %v487
    %v572 = vadd.f32 %v456, %v491
    %v573 = vadd.f32 %v457, %v495
    %v574 = vadd.f32 %v458, %v499
    %v575 = vadd.f32 %v459, %v503
    %v576 = vadd.f32 %v460, %v507
    %v577 = vadd.f32 %v461, %v511
    %v578 = vadd.f32 %v462, %v515
    %v579 = vadd.f32 %v463, %v519
    %v580 = vadd.f32 %v464, %v523
    %v581 = vadd.f32 %v465, %v527
    %v582 = vadd.f32 %v466, %v531
    %v583 = vadd.f32 %v467, %v535
    %616 = vset.pattern.permute.xlu0 0
    %617 = vperm.xlu0 %616, %v552
    %v618 = vpop.permute.xlu0 %617
    %619 = vset.pattern.permute.xlu0 0
    %620 = vperm.xlu0 %619, %v553
    %v621 = vpop.permute.xlu0 %620
    %622 = vset.pattern.permute.xlu0 0
    %623 = vperm.xlu0 %622, %v554
    %v624 = vpop.permute.xlu0 %623
    %625 = vset.pattern.permute.xlu0 0
    %626 = vperm.xlu0 %625, %v555
    %v627 = vpop.permute.xlu0 %626
    %628 = vset.pattern.permute.xlu0 0
    %629 = vperm.xlu0 %628, %v556
    %v630 = vpop.permute.xlu0 %629
    %631 = vset.pattern.permute.xlu0 0
    %632 = vperm.xlu0 %631, %v557
    %v633 = vpop.permute.xlu0 %632
    %634 = vset.pattern.permute.xlu0 0
    %635 = vperm.xlu0 %634, %v558
    %v636 = vpop.permute.xlu0 %635
    %637 = vset.pattern.permute.xlu0 0
    %638 = vperm.xlu0 %637, %v559
    %v639 = vpop.permute.xlu0 %638
    %640 = vset.pattern.permute.xlu0 0
    %641 = vperm.xlu0 %640, %v560
    %v642 = vpop.permute.xlu0 %641
    %643 = vset.pattern.permute.xlu0 0
    %644 = vperm.xlu0 %643, %v561
    %v645 = vpop.permute.xlu0 %644
    %646 = vset.pattern.permute.xlu0 0
    %647 = vperm.xlu0 %646, %v562
    %v648 = vpop.permute.xlu0 %647
    %649 = vset.pattern.permute.xlu0 0
    %650 = vperm.xlu0 %649, %v563
    %v651 = vpop.permute.xlu0 %650
    %652 = vset.pattern.permute.xlu0 0
    %653 = vperm.xlu0 %652, %v564
    %v654 = vpop.permute.xlu0 %653
    %655 = vset.pattern.permute.xlu0 0
    %656 = vperm.xlu0 %655, %v565
    %v657 = vpop.permute.xlu0 %656
    %658 = vset.pattern.permute.xlu0 0
    %659 = vperm.xlu0 %658, %v566
    %v660 = vpop.permute.xlu0 %659
    %661 = vset.pattern.permute.xlu0 0
    %662 = vperm.xlu0 %661, %v567
    %v663 = vpop.permute.xlu0 %662
    %664 = vset.pattern.permute.xlu0 0
    %665 = vperm.xlu0 %664, %v568
    %v666 = vpop.permute.xlu0 %665
    %667 = vset.pattern.permute.xlu0 0
    %668 = vperm.xlu0 %667, %v569
    %v669 = vpop.permute.xlu0 %668
    %670 = vset.pattern.permute.xlu0 0
    %671 = vperm.xlu0 %670, %v570
    %v672 = vpop.permute.xlu0 %671
    %673 = vset.pattern.permute.xlu0 0
    %674 = vperm.xlu0 %673, %v571
    %v675 = vpop.permute.xlu0 %674
    %676 = vset.pattern.permute.xlu0 0
    %677 = vperm.xlu0 %676, %v572
    %v678 = vpop.permute.xlu0 %677
    %679 = vset.pattern.permute.xlu0 0
    %680 = vperm.xlu0 %679, %v573
    %v681 = vpop.permute.xlu0 %680
    %682 = vset.pattern.permute.xlu0 0
    %683 = vperm.xlu0 %682, %v574
    %v684 = vpop.permute.xlu0 %683
    %685 = vset.pattern.permute.xlu0 0
    %686 = vperm.xlu0 %685, %v575
    %v687 = vpop.permute.xlu0 %686
    %688 = vset.pattern.permute.xlu0 0
    %689 = vperm.xlu0 %688, %v576
    %v690 = vpop.permute.xlu0 %689
    %691 = vset.pattern.permute.xlu0 0
    %692 = vperm.xlu0 %691, %v577
    %v693 = vpop.permute.xlu0 %692
    %694 = vset.pattern.permute.xlu0 0
    %695 = vperm.xlu0 %694, %v578
    %v696 = vpop.permute.xlu0 %695
    %697 = vset.pattern.permute.xlu0 0
    %698 = vperm.xlu0 %697, %v579
    %v699 = vpop.permute.xlu0 %698
    %700 = vset.pattern.permute.xlu0 0
    %701 = vperm.xlu0 %700, %v580
    %v702 = vpop.permute.xlu0 %701
    %703 = vset.pattern.permute.xlu0 0
    %704 = vperm.xlu0 %703, %v581
    %v705 = vpop.permute.xlu0 %704
    %706 = vset.pattern.permute.xlu0 0
    %707 = vperm.xlu0 %706, %v582
    %v708 = vpop.permute.xlu0 %707
    %709 = vset.pattern.permute.xlu0 0
    %710 = vperm.xlu0 %709, %v583
    %v711 = vpop.permute.xlu0 %710
    %v712 = vlaneseq
    %v713 = vand.u32 %v712, 127
    %v714 = vlaneseq
    %v715 = vshrl.u32 %v714, 7
    %v716 = vsub.s32 %v713, %v715
    %v717 = vrot.slane %v618, %v716
    %v718 = vadd.s32 %v713, 4294967288
    %v719 = vlaneseq
    %v720 = vshrl.u32 %v719, 7
    %v721 = vsub.s32 %v718, %v720
    %v722 = vrot.slane %v621, %v721
    %vm723 = vcmask 130112
    %v724 = vsel %vm723, %v722, %v717
    %v725 = vadd.s32 %v713, 4294967280
    %v726 = vlaneseq
    %v727 = vshrl.u32 %v726, 7
    %v728 = vsub.s32 %v725, %v727
    %v729 = vrot.slane %v624, %v728
    %vm730 = vcmask 195712
    %v731 = vsel %vm730, %v729, %v724
    %v732 = vadd.s32 %v713, 4294967272
    %v733 = vlaneseq
    %v734 = vshrl.u32 %v733, 7
    %v735 = vsub.s32 %v732, %v734
    %v736 = vrot.slane %v627, %v735
    %vm737 = vcmask 261312
    %v738 = vsel %vm737, %v736, %v731
    %v739 = vadd.s32 %v713, 4294967264
    %v740 = vlaneseq
    %v741 = vshrl.u32 %v740, 7
    %v742 = vsub.s32 %v739, %v741
    %v743 = vrot.slane %v630, %v742
    %vm744 = vcmask 326912
    %v745 = vsel %vm744, %v743, %v738
    %v746 = vadd.s32 %v713, 4294967256
    %v747 = vlaneseq
    %v748 = vshrl.u32 %v747, 7
    %v749 = vsub.s32 %v746, %v748
    %v750 = vrot.slane %v633, %v749
    %vm751 = vcmask 392512
    %v752 = vsel %vm751, %v750, %v745
    %v753 = vadd.s32 %v713, 4294967248
    %v754 = vlaneseq
    %v755 = vshrl.u32 %v754, 7
    %v756 = vsub.s32 %v753, %v755
    %v757 = vrot.slane %v636, %v756
    %vm758 = vcmask 458112
    %v759 = vsel %vm758, %v757, %v752
    %v760 = vadd.s32 %v713, 4294967240
    %v761 = vlaneseq
    %v762 = vshrl.u32 %v761, 7
    %v763 = vsub.s32 %v760, %v762
    %v764 = vrot.slane %v639, %v763
    %vm765 = vcmask 523712
    %v766 = vsel %vm765, %v764, %v759
    %v767 = vadd.s32 %v713, 4294967232
    %v768 = vlaneseq
    %v769 = vshrl.u32 %v768, 7
    %v770 = vsub.s32 %v767, %v769
    %v771 = vrot.slane %v642, %v770
    %vm772 = vcmask 589312
    %v773 = vsel %vm772, %v771, %v766
    %v774 = vadd.s32 %v713, 4294967224
    %v775 = vlaneseq
    %v776 = vshrl.u32 %v775, 7
    %v777 = vsub.s32 %v774, %v776
    %v778 = vrot.slane %v645, %v777
    %vm779 = vcmask 654912
    %v780 = vsel %vm779, %v778, %v773
    %v781 = vadd.s32 %v713, 4294967216
    %v782 = vlaneseq
    %v783 = vshrl.u32 %v782, 7
    %v784 = vsub.s32 %v781, %v783
    %v785 = vrot.slane %v648, %v784
    %vm786 = vcmask 720512
    %v787 = vsel %vm786, %v785, %v780
    %v788 = vadd.s32 %v713, 4294967208
    %v789 = vlaneseq
    %v790 = vshrl.u32 %v789, 7
    %v791 = vsub.s32 %v788, %v790
    %v792 = vrot.slane %v651, %v791
    %vm793 = vcmask 786112
    %v794 = vsel %vm793, %v792, %v787
    %v795 = vadd.s32 %v713, 4294967200
    %v796 = vlaneseq
    %v797 = vshrl.u32 %v796, 7
    %v798 = vsub.s32 %v795, %v797
    %v799 = vrot.slane %v654, %v798
    %vm800 = vcmask 851712
    %v801 = vsel %vm800, %v799, %v794
    %v802 = vadd.s32 %v713, 4294967192
    %v803 = vlaneseq
    %v804 = vshrl.u32 %v803, 7
    %v805 = vsub.s32 %v802, %v804
    %v806 = vrot.slane %v657, %v805
    %vm807 = vcmask 917312
    %v808 = vsel %vm807, %v806, %v801
    %v809 = vadd.s32 %v713, 4294967184
    %v810 = vlaneseq
    %v811 = vshrl.u32 %v810, 7
    %v812 = vsub.s32 %v809, %v811
    %v813 = vrot.slane %v660, %v812
    %vm814 = vcmask 982912
    %v815 = vsel %vm814, %v813, %v808
    %v816 = vadd.s32 %v713, 4294967176
    %v817 = vlaneseq
    %v818 = vshrl.u32 %v817, 7
    %v819 = vsub.s32 %v816, %v818
    %v820 = vrot.slane %v663, %v819
    %vm821 = vcmask 1048512
    %v822 = vsel %vm821, %v820, %v815
    %v823 = vlaneseq
    %v824 = vshrl.u32 %v823, 7
    %v825 = vsub.s32 %v713, %v824
    %v826 = vrot.slane %v666, %v825
    %v827 = vlaneseq
    %v828 = vshrl.u32 %v827, 7
    %v829 = vsub.s32 %v718, %v828
    %v830 = vrot.slane %v669, %v829
    %v831 = vsel %vm723, %v830, %v826
    %v832 = vlaneseq
    %v833 = vshrl.u32 %v832, 7
    %v834 = vsub.s32 %v725, %v833
    %v835 = vrot.slane %v672, %v834
    %v836 = vsel %vm730, %v835, %v831
    %v837 = vlaneseq
    %v838 = vshrl.u32 %v837, 7
    %v839 = vsub.s32 %v732, %v838
    %v840 = vrot.slane %v675, %v839
    %v841 = vsel %vm737, %v840, %v836
    %v842 = vlaneseq
    %v843 = vshrl.u32 %v842, 7
    %v844 = vsub.s32 %v739, %v843
    %v845 = vrot.slane %v678, %v844
    %v846 = vsel %vm744, %v845, %v841
    %v847 = vlaneseq
    %v848 = vshrl.u32 %v847, 7
    %v849 = vsub.s32 %v746, %v848
    %v850 = vrot.slane %v681, %v849
    %v851 = vsel %vm751, %v850, %v846
    %v852 = vlaneseq
    %v853 = vshrl.u32 %v852, 7
    %v854 = vsub.s32 %v753, %v853
    %v855 = vrot.slane %v684, %v854
    %v856 = vsel %vm758, %v855, %v851
    %v857 = vlaneseq
    %v858 = vshrl.u32 %v857, 7
    %v859 = vsub.s32 %v760, %v858
    %v860 = vrot.slane %v687, %v859
    %v861 = vsel %vm765, %v860, %v856
    %v862 = vlaneseq
    %v863 = vshrl.u32 %v862, 7
    %v864 = vsub.s32 %v767, %v863
    %v865 = vrot.slane %v690, %v864
    %v866 = vsel %vm772, %v865, %v861
    %v867 = vlaneseq
    %v868 = vshrl.u32 %v867, 7
    %v869 = vsub.s32 %v774, %v868
    %v870 = vrot.slane %v693, %v869
    %v871 = vsel %vm779, %v870, %v866
    %v872 = vlaneseq
    %v873 = vshrl.u32 %v872, 7
    %v874 = vsub.s32 %v781, %v873
    %v875 = vrot.slane %v696, %v874
    %v876 = vsel %vm786, %v875, %v871
    %v877 = vlaneseq
    %v878 = vshrl.u32 %v877, 7
    %v879 = vsub.s32 %v788, %v878
    %v880 = vrot.slane %v699, %v879
    %v881 = vsel %vm793, %v880, %v876
    %v882 = vlaneseq
    %v883 = vshrl.u32 %v882, 7
    %v884 = vsub.s32 %v795, %v883
    %v885 = vrot.slane %v702, %v884
    %v886 = vsel %vm800, %v885, %v881
    %v887 = vlaneseq
    %v888 = vshrl.u32 %v887, 7
    %v889 = vsub.s32 %v802, %v888
    %v890 = vrot.slane %v705, %v889
    %v891 = vsel %vm807, %v890, %v886
    %v892 = vlaneseq
    %v893 = vshrl.u32 %v892, 7
    %v894 = vsub.s32 %v809, %v893
    %v895 = vrot.slane %v708, %v894
    %v896 = vsel %vm814, %v895, %v891
    %v897 = vlaneseq
    %v898 = vshrl.u32 %v897, 7
    %v899 = vsub.s32 %v816, %v898
    %v900 = vrot.slane %v711, %v899
    %v901 = vsel %vm821, %v900, %v896
    %vm902 = vcmask 1041409
    %v903 = vsel %vm902, %v901, %v822
    %905 = vst [vmem:[#allocation2] sm:$0x3] %v903
    // Predicated region
    $region10: #{build_model_forward.1} parent=1 // pred_check
      _
    $region11: #{build_model_forward.1} parent=1 // pred_check_branch
      %907 = sbr.rel (0) target = $region13
    $region12: #{build_model_forward.1} parent=1 // pred_region
      %s909 = ssub.s32 32, 32
      %910 = vsyncadd [#allocation3], %s909
      %s912 = sshll.u32 [#allocation2], 4
      %s913 = int_to_ptr.vmem [resolvable:$true] %s912
      %915 = dma.vmem_to_hbm [thread:$0]  %s913, 32, %s2, [#allocation3]
    $region13: #{build_model_forward.1} parent=1 // pred_fallthru
      _
    // Predicated region
    $region14: #{build_model_forward.1} parent=1 // pred_check
      _
    $region15: #{build_model_forward.1} parent=1 // pred_check_branch
      %917 = sbr.rel (0) target = $region17
    $region16: #{build_model_forward.1} parent=1 // pred_region
      %918 = dma.done [#allocation3], 32
    $region17: #{build_model_forward.1} parent=1 // pred_fallthru
      _
    %919 = vsyncpa [#allocation3], 1

</llo_original>
